<compile_context>
chip_gen: v7x
topology: tpu7x:2x2x1
jax: 0.10.0
libtpu: 0.0.40
codegen_flags: <defaults>
</compile_context>

<pallas_src>
import functools

import jax
import jax.numpy as jnp
from jax.experimental import pallas as pl
from jax.experimental.pallas import tpu as pltpu


LANES = 512                      # lane-dense: wide multiple of 128 -> unmasked vst
TARGET_TILE_BYTES = 2 * 1024 * 1024   # ~2 MiB/block; x4 (in+out, double-buffered) = 8 MiB VMEM
SMALL_INPUT_ELEMS = 64 * 1024    # below this, XLA's fused elementwise op beats a custom call


def _round_up(v, m):
    return ((v + m - 1) // m) * m


def _clamp_kernel_static(x_ref, o_ref, *, lo, hi):
    # Bounds baked in as trace-time constants (cast to the tensor dtype).
    dt = x_ref.dtype
    o_ref[...] = jnp.maximum(jnp.minimum(x_ref[...], jnp.asarray(hi, dt)),
                             jnp.asarray(lo, dt))


def _clamp_kernel_dynamic(bounds_ref, x_ref, o_ref):
    # bounds live in SMEM as [min, max] (f32); x/o are VMEM tiles.
    x = x_ref[...]
    lo = bounds_ref[0].astype(x.dtype)
    hi = bounds_ref[1].astype(x.dtype)
    # Match torch.max(torch.min(x, max), min): min applied last (outer max).
    o_ref[...] = jnp.maximum(jnp.minimum(x, hi), lo)


def clamp_invert_gradient(x, min_val, max_val, *,
                          lanes=LANES,
                          target_tile_bytes=TARGET_TILE_BYTES,
                          small_input_elems=SMALL_INPUT_ELEMS):
    """Forward pass of ClampInvertGradient: elementwise clamp(x, min, max).

    Works for any input shape/rank. Internally flattens to a lane-dense
    (rows, lanes) slab and tiles rows over a 1-D grid — no host-side padding
    or tail slicing on the hot path.
    """
    # TODO(synk): the custom inverted-gradient backward is an autograd rule
    # (jax.custom_vjp in JAX-land), not forward math; only the forward clamp
    # is implemented here.
    orig_shape = x.shape
    total = int(x.size)
    if total == 0:
        return x

    static_bounds = isinstance(min_val, (int, float)) and isinstance(max_val, (int, float))

    def _xla_fallback():
        lo = jnp.asarray(min_val, x.dtype)
        hi = jnp.asarray(max_val, x.dtype)
        return jnp.maximum(jnp.minimum(x, hi), lo)

    # Tiny tensors: custom-call dispatch + reshape plumbing costs more than the
    # fused XLA elementwise op.
    if total < small_input_elems:
        return _xla_fallback()

    # Widest lane count (multiple of 128) that divides the flattened size, so
    # no un-fusable jnp.pad / tail-slice (each a full-array HBM copy) is needed.
    lanes_eff = None
    for cand in (lanes, 256, 128):
        if total % cand == 0:
            lanes_eff = cand
            break
    if lanes_eff is None:
        # Ragged tail (< 128 elems): pad + slice would roughly double HBM
        # traffic, so the fused XLA clamp is strictly better here.
        # TODO(synk): an in-kernel masked tail store (pl.when + pltpu.store)
        # would enable a pad-free Pallas path for these shapes too.
        return _xla_fallback()

    rows = total // lanes_eff
    itemsize = jnp.dtype(x.dtype).itemsize

    # Tile rows: ~target_tile_bytes per block to amortize the ~0.35 us/step
    # overhead, but keep >= ~8 grid steps so both v7x TensorCores get work.
    # Multiple of 32 rows covers the native sublane tiling of f32/bf16/int8.
    tr = target_tile_bytes // (lanes_eff * itemsize)
    tr = min(tr, _round_up(pl.cdiv(rows, 8), 32))
    tr = max(tr, 32)
    if tr >= rows:
        tr = rows  # single block == full extent (no divisibility constraint)

    x2d = x.reshape(rows, lanes_eff)  # reshape of a contiguous array: free
    grid = (pl.cdiv(rows, tr),)

    x_spec = pl.BlockSpec((tr, lanes_eff), lambda i: (i, 0))
    o_spec = pl.BlockSpec((tr, lanes_eff), lambda i: (i, 0))

    if static_bounds:
        kernel = functools.partial(_clamp_kernel_static,
                                   lo=float(min_val), hi=float(max_val))
        in_specs = [x_spec]
        args = (x2d,)
    else:
        kernel = _clamp_kernel_dynamic
        in_specs = [pl.BlockSpec(memory_space=pltpu.SMEM), x_spec]
        bounds = jnp.stack([jnp.asarray(min_val, jnp.float32),
                            jnp.asarray(max_val, jnp.float32)])
        args = (bounds, x2d)

    out2d = pl.pallas_call(
        kernel,
        out_shape=jax.ShapeDtypeStruct((rows, lanes_eff), x.dtype),
        grid_spec=pltpu.PrefetchScalarGridSpec(
            num_scalar_prefetch=0,
            grid=grid,
            in_specs=in_specs,
            out_specs=o_spec,
        ),
        compiler_params=pltpu.CompilerParams(
            dimension_semantics=("parallel",),   # independent tiles -> megacore sharding
        ),
    )(*args)

    return out2d.reshape(orig_shape)


if __name__ == "__main__":
    key = jax.random.PRNGKey(0)
    min_val, max_val = -0.5, 0.5

    # 1) Small NCHW tensor consistent with the module (batch=2, channels=4, 16x16),
    #    forcing the Pallas path (single full-extent block).
    x1 = jax.random.normal(key, (2, 4, 16, 16), dtype=jnp.float32)
    y1 = jax.block_until_ready(
        clamp_invert_gradient(x1, min_val, max_val, small_input_elems=0))
    ref1 = jnp.maximum(jnp.minimum(x1, max_val), min_val)
    assert y1.shape == x1.shape and y1.dtype == x1.dtype
    assert jnp.array_equal(y1, ref1)

    # 2) Larger tensor exercising the tiled multi-step grid (256 rows x 512 lanes,
    #    8 grid steps) via the default path.
    k2, k3 = jax.random.split(key)
    x2 = jax.random.normal(k2, (4, 8, 64, 64), dtype=jnp.float32)
    y2 = jax.block_until_ready(clamp_invert_gradient(x2, min_val, max_val))
    ref2 = jnp.maximum(jnp.minimum(x2, max_val), min_val)
    assert jnp.array_equal(y2, ref2)

    # 3) bf16 input with dynamic (traced) bounds -> SMEM bounds path.
    x3 = jax.random.normal(k3, (2, 4, 32, 32), dtype=jnp.bfloat16)
    y3 = jax.block_until_ready(
        clamp_invert_gradient(x3, jnp.float32(min_val), jnp.float32(max_val),
                              small_input_elems=0))
    ref3 = jnp.maximum(jnp.minimum(x3, jnp.bfloat16(max_val)), jnp.bfloat16(min_val))
    assert y3.dtype == x3.dtype
    assert jnp.array_equal(y3, ref3)

    print("KERNEL_OK")
</pallas_src>

<mosaic_0001>
module attributes {stable_mosaic.version = 11 : i64} {
  func.func @_clamp_kernel_static(%arg0: i32, %arg1: memref<4x512xf32, #tpu.memory_space<vmem>>, %arg2: memref<4x512xf32, #tpu.memory_space<vmem>>) attributes {dimension_semantics = [#tpu.dimension_semantics<parallel>], iteration_bounds = array<i64: 1>, scalar_prefetch = 0 : i64, scratch_operands = 0 : i64, tpu.core_type = #tpu.core_type<tc>, window_params = [{transform_indices = @transform_0, window_bounds = array<i64: 4, 512>}, {transform_indices = @transform_1, window_bounds = array<i64: 4, 512>}]} {
    %c0 = arith.constant 0 : index
    %c0_0 = arith.constant 0 : index
    %0 = vector.load %arg1[%c0, %c0_0] : memref<4x512xf32, #tpu.memory_space<vmem>>, vector<4x512xf32>
    %cst = arith.constant 5.000000e-01 : f32
    %1 = vector.broadcast %cst : f32 to vector<4x512xf32>
    %2 = arith.minimumf %0, %1 : vector<4x512xf32>
    %cst_1 = arith.constant -5.000000e-01 : f32
    %3 = vector.broadcast %cst_1 : f32 to vector<4x512xf32>
    %4 = arith.maximumf %2, %3 : vector<4x512xf32>
    %c0_2 = arith.constant 0 : index
    %c0_3 = arith.constant 0 : index
    %5 = vector.load %arg2[%c0_2, %c0_3] : memref<4x512xf32, #tpu.memory_space<vmem>>, vector<4x512xf32>
    tpu.vector_store %arg2[%c0_2, %c0_3], %4 {strides = array<i32>} : memref<4x512xf32, #tpu.memory_space<vmem>>, vector<4x512xf32>,
    return
  }
  func.func @transform_0(%arg0: i32) -> (i32, i32) {
    %c0_i32 = arith.constant 0 : i32
    %c0_i32_0 = arith.constant 0 : i32
    return %arg0, %c0_i32 : i32, i32
  }
  func.func @transform_1(%arg0: i32) -> (i32, i32) {
    %c0_i32 = arith.constant 0 : i32
    %c0_i32_0 = arith.constant 0 : i32
    return %arg0, %c0_i32 : i32, i32
  }
}

</mosaic_0001>

<llo_original>
// kernel: tpu_custom_call.1
$region0: #{tpu_custom_call.1}
  #allocation0 [shape = 'u32[]', space=smem, size = 0x4, offset = 0x4, fixed_abs, tag = 'smem constant byte address 0x4 - core index']
  #allocation1 [shape = 'u32[144,128]{1,0:T(1,128)}', space=vmem, size = 0x12000, scoped, tag = 'internal scratch']
  %s0 = inlined_call_operand.hbm [shape: f32[4,512], index: 0, kind: input, shape index: {}]
  %s1 = inlined_call_operand.hbm [shape: f32[4,512], index: 1, kind: output, shape index: {}]
  %s2 = sld [smem:[#allocation0]]
  $region18: #{tpu_custom_call.1} parent=0
    _
  %s4 = ssub.s32 1, %s2
  %s5 = scalar_select 0, %s4, %s2
  $region1: #{tpu_custom_call.1} parent=0
    #allocation2 [shape = 'u8[8192]{0}', space=vmem, size = 0x2000, scoped, tag = 'input window, operand 0, single buffered']
    #allocation3 [shape = 's32[1]{0}', space=sflag, size = 0x4, scoped, tag = 'scoped memory for tpu_custom_call.1']
    #allocation4 [shape = 's32[1]{0}', space=sflag, size = 0x4, scoped, tag = 'scoped memory for tpu_custom_call.1']
    #allocation5 [shape = 'u8[8192]{0}', space=vmem, size = 0x2000, scoped, tag = 'output window, operand 0, single buffered']
    %6 = vsyncpa [#allocation3], 0
    %7 = vsyncpa [#allocation4], 0
    // Predicated region
    $region2: #{tpu_custom_call.1} parent=1 // pred_check
      _
    $region3: #{tpu_custom_call.1} parent=1 // pred_check_branch
      %9 = sbr.rel (0) target = $region5
    $region4: #{tpu_custom_call.1} parent=1 // pred_region
      %s11 = ssub.s32 256, 256
      %12 = vsyncadd [#allocation3], %s11
      %s14 = sshll.u32 [#allocation2], 4
      %s15 = int_to_ptr.vmem [resolvable:$true] %s14
      %17 = dma.hbm_to_vmem [thread:$0]  %s0, 256, %s15, [#allocation3]
    $region5: #{tpu_custom_call.1} parent=1 // pred_fallthru
      _
    // Predicated region
    $region6: #{tpu_custom_call.1} parent=1 // pred_check
      _
    $region7: #{tpu_custom_call.1} parent=1 // pred_check_branch
      %19 = sbr.rel (0) target = $region9
    $region8: #{tpu_custom_call.1} parent=1 // pred_region
      %20 = dma.done [#allocation3], 256
    $region9: #{tpu_custom_call.1} parent=1 // pred_fallthru
      _
    %v21 = vld [vmem:[#allocation2] sm:$0xff]
    %v22 = vld [vmem:[#allocation2 + $0x8] sm:$0xff]
    %v23 = vmin.f32 %v21, 0.5
    %v24 = vmin.f32 %v22, 0.5
    %v25 = vmax.f32 %v23, -0.5
    %v26 = vmax.f32 %v24, -0.5
    %27 = vst [vmem:[#allocation5] sm:$0xff] %v25
    %28 = vst [vmem:[#allocation5 + $0x8] sm:$0xff] %v26
    // Predicated region
    $region10: #{tpu_custom_call.1} parent=1 // pred_check
      _
    $region11: #{tpu_custom_call.1} parent=1 // pred_check_branch
      %30 = sbr.rel (0) target = $region13
    $region12: #{tpu_custom_call.1} parent=1 // pred_region
      %s32 = ssub.s32 256, 256
      %33 = vsyncadd [#allocation4], %s32
      %s35 = sshll.u32 [#allocation5], 4
      %s36 = int_to_ptr.vmem [resolvable:$true] %s35
      %38 = dma.vmem_to_hbm [thread:$0]  %s36, 256, %s1, [#allocation4]
    $region13: #{tpu_custom_call.1} parent=1 // pred_fallthru
      _
    // Predicated region
    $region14: #{tpu_custom_call.1} parent=1 // pred_check
      _
    $region15: #{tpu_custom_call.1} parent=1 // pred_check_branch
      %40 = sbr.rel (0) target = $region17
    $region16: #{tpu_custom_call.1} parent=1 // pred_region
      %41 = dma.done [#allocation4], 256
    $region17: #{tpu_custom_call.1} parent=1 // pred_fallthru
      _
    %42 = vsyncpa [#allocation3], 1
    %43 = vsyncpa [#allocation4], 1

</llo_original>
